<compile_context>
chip_gen: v7x
topology: tpu7x:2x2x1
jax: 0.10.0
libtpu: 0.0.40
codegen_flags: <defaults>
</compile_context>

<pallas_src>
import jax
import jax.numpy as jnp
from jax.experimental import pallas as pl
from jax.experimental.pallas import tpu as pltpu


def _attention_kernel(x_ref, w_ref, b_ref, ctx_ref, attw_ref):
    # x_ref:    (Bt, S, H)  lstm_output tile, native dtype   (VMEM)
    # w_ref:    (1, H)      Linear weight row, native dtype  (VMEM, lane-dense)
    # b_ref:    (1,)        Linear bias, f32                 (SMEM scalar)
    # ctx_ref:  (Bt, H)     context vectors   (lane-dense along H)
    # attw_ref: (Bt, S)     attention weights (lane-dense along S)
    x = x_ref[...]                                   # no whole-tile upcast
    Bt, S, H = x.shape
    bias = b_ref[0]                                  # f32 scalar from SMEM

    # scores[b, s] = <x[b, s, :], w> + bias
    # Batched MXU contraction over H (flash-attention 'bqd,bkd->bqk' pattern
    # with q=1), f32 accumulation; result already lane-dense along S.
    w_b = jnp.broadcast_to(w_ref[...].reshape(1, 1, H), (Bt, 1, H))
    s3 = jnp.einsum("bkh,bsh->bks", w_b, x,
                    preferred_element_type=jnp.float32)        # (Bt, 1, S)
    scores = s3[:, 0, :] + bias                                 # (Bt, S) f32

    # numerically stable softmax over the sequence axis (torch dim=1), f32
    m = jnp.max(scores, axis=-1, keepdims=True)                 # (Bt, 1)
    e = jnp.exp(scores - m)                                     # (Bt, S)
    denom = jnp.sum(e, axis=-1, keepdims=True)                  # (Bt, 1)
    inv = pl.reciprocal(denom, approx=True)                     # EUP slot
    inv = inv * (2.0 - denom * inv)                             # Newton -> f32 accurate
    attw = e * inv                                              # (Bt, S) f32
    attw_ref[...] = attw.astype(attw_ref.dtype)                 # lane-dense store

    # context[b, :] = sum_s attw[b, s] * x[b, s, :]
    # Batched MXU contraction over S in the native dtype, f32 accumulation.
    p = attw.astype(x.dtype)[:, None, :]                        # (Bt, 1, S)
    ctx3 = jnp.einsum("bqs,bsh->bqh", p, x,
                      preferred_element_type=jnp.float32)       # (Bt, 1, H)
    ctx_ref[...] = ctx3[:, 0, :].astype(ctx_ref.dtype)


def attention_forward(lstm_output, weight, bias, *, block_b=None,
                      block_bytes=8 * 1024 * 1024,
                      vmem_budget=24 * 1024 * 1024):
    """Forward pass of the Attention module.

    lstm_output: (B, S, H)
    weight:      (1, H)   -- torch nn.Linear(H, 1).weight layout
    bias:        (1,)     -- torch nn.Linear(H, 1).bias
    Returns (context_vector (B, H), attention_weights (B, S, 1)).
    """
    B, S, H = lstm_output.shape
    dtype = lstm_output.dtype
    itemsize = jnp.dtype(dtype).itemsize
    w_row = jnp.asarray(weight).reshape(1, H).astype(dtype)     # MXU native dtype
    b_smem = jnp.asarray(bias).reshape(1).astype(jnp.float32)   # SMEM scalar

    # Per-batch-row footprints: HBM bytes (tile-size driver) and the VMEM
    # working set (double-buffered input tile + f32 softmax rows/accumulators
    # + double-buffered output tiles) used to keep v7x's 64 MiB VMEM safe.
    bytes_per_row = S * H * itemsize
    vmem_per_row = (2 * bytes_per_row            # input tile, 2 buffers
                    + 6 * S * 4                  # f32 scores/exp/attw + MXU acc rows
                    + 2 * (S + H) * itemsize     # attw/ctx output tiles, 2 buffers
                    + 2 * H * 4)                 # f32 context accumulator row

    if block_b is None:
        rows = max(1, min(block_bytes // bytes_per_row,
                          vmem_budget // vmem_per_row))
        block_b = min(B, rows)
        # Keep >= 2 (>= 4 for larger B) grid steps when B allows: overlaps the
        # HBM DMA with compute via BlockSpec double-buffering and lets the
        # "parallel" batch axis shard across the two TensorCores on v7x.
        if B >= 16:
            target_steps = 4 if B >= 64 else 2
            block_b = min(block_b, max(8, (B // target_steps) // 8 * 8))
    if block_b < B:
        block_b = max(8, (block_b // 8) * 8)     # sublane-aligned tiles
        block_b = min(block_b, B)
    grid_b = pl.cdiv(B, block_b)
    # TODO(synk): add an S-tiled (online-softmax) path when even an 8-row block
    # exceeds the VMEM budget (very large S*H); currently we just raise the limit.

    vmem_est = vmem_per_row * block_b + (1 << 20)            # + Mosaic internals slack
    vmem_limit = min(max(32 << 20, int(vmem_est * 1.25)), 60 << 20)

    ctx, attw2d = pl.pallas_call(
        _attention_kernel,
        out_shape=(
            jax.ShapeDtypeStruct((B, H), dtype),
            jax.ShapeDtypeStruct((B, S), dtype),
        ),
        grid_spec=pltpu.PrefetchScalarGridSpec(
            num_scalar_prefetch=0,
            grid=(grid_b,),
            in_specs=[
                pl.BlockSpec((block_b, S, H), lambda b: (b, 0, 0)),
                pl.BlockSpec((1, H), lambda b: (0, 0)),
                pl.BlockSpec(memory_space=pltpu.MemorySpace.SMEM),
            ],
            out_specs=[
                pl.BlockSpec((block_b, H), lambda b: (b, 0)),
                pl.BlockSpec((block_b, S), lambda b: (b, 0)),
            ],
        ),
        compiler_params=pltpu.CompilerParams(
            dimension_semantics=("parallel",),
            vmem_limit_bytes=vmem_limit),
    )(lstm_output, w_row, b_smem)

    # PyTorch returns attention_weights with a trailing singleton dim; add it
    # in the wrapper so the kernel's store stays lane-dense.
    return ctx, attw2d[:, :, None]


def reference_forward(lstm_output, weight, bias):
    scores = jnp.einsum("bsh,oh->bso", lstm_output, weight) + bias.reshape(1, 1, 1)
    attw = jax.nn.softmax(scores, axis=1)
    ctx = jnp.sum(attw * lstm_output, axis=1)
    return ctx, attw


if __name__ == "__main__":
    B, S, H = 2, 8, 32
    key = jax.random.PRNGKey(0)
    kx, kw, kb = jax.random.split(key, 3)

    lstm_output = jax.random.normal(kx, (B, S, H), dtype=jnp.float32)
    # deterministic Linear(hidden_size, 1) params: uniform(-1/sqrt(H), 1/sqrt(H))
    bound = 1.0 / (H ** 0.5)
    weight = jax.random.uniform(kw, (1, H), jnp.float32, -bound, bound)
    bias = jax.random.uniform(kb, (1,), jnp.float32, -bound, bound)

    ctx, attw = attention_forward(lstm_output, weight, bias)
    jax.block_until_ready((ctx, attw))

    ctx_ref, attw_ref = reference_forward(lstm_output, weight, bias)
    assert ctx.shape == (B, H) and attw.shape == (B, S, 1)
    assert jnp.allclose(ctx, ctx_ref, atol=1e-5, rtol=1e-5)
    assert jnp.allclose(attw, attw_ref, atol=1e-5, rtol=1e-5)

    print("KERNEL_OK")
</pallas_src>

<mosaic_0001>
module attributes {stable_mosaic.version = 11 : i64} {
  func.func @_attention_kernel(%arg0: i32, %arg1: memref<2x8x32xf32, #tpu.memory_space<vmem>>, %arg2: memref<1x32xf32, #tpu.memory_space<vmem>>, %arg3: memref<1xf32, #tpu.memory_space<smem>>, %arg4: memref<2x32xf32, #tpu.memory_space<vmem>>, %arg5: memref<2x8xf32, #tpu.memory_space<vmem>>) attributes {dimension_semantics = [#tpu.dimension_semantics<parallel>], iteration_bounds = array<i64: 1>, scalar_prefetch = 0 : i64, scratch_operands = 0 : i64, tpu.core_type = #tpu.core_type<tc>, window_params = [{transform_indices = @transform_0, window_bounds = array<i64: 2, 8, 32>}, {pipeline_mode = #tpu.pipeline_mode<synchronous>, transform_indices = @transform_1, window_bounds = array<i64: 1, 32>}, {transform_indices = @transform_2, window_bounds = array<i64: 1>}, {transform_indices = @transform_3, window_bounds = array<i64: 2, 32>}, {transform_indices = @transform_4, window_bounds = array<i64: 2, 8>}]} {
    %c0 = arith.constant 0 : index
    %c0_0 = arith.constant 0 : index
    %c0_1 = arith.constant 0 : index
    %0 = vector.load %arg1[%c0, %c0_0, %c0_1] : memref<2x8x32xf32, #tpu.memory_space<vmem>>, vector<2x8x32xf32>
    %c0_2 = arith.constant 0 : index
    %1 = memref.load %arg3[%c0_2] : memref<1xf32, #tpu.memory_space<smem>>
    %c0_3 = arith.constant 0 : index
    %c0_4 = arith.constant 0 : index
    %2 = vector.load %arg2[%c0_3, %c0_4] : memref<1x32xf32, #tpu.memory_space<vmem>>, vector<1x32xf32>
    %3 = vector.shape_cast %2 : vector<1x32xf32> to vector<1x1x32xf32>
    %4 = vector.shape_cast %3 : vector<1x1x32xf32> to vector<1x1x32xf32>
    %5 = vector.broadcast %4 : vector<1x1x32xf32> to vector<2x1x32xf32>
    "tpu.trace_start"() <{level = 10 : i32, message = "bkh,bsh->bks"}> : () -> ()
    %cst = arith.constant dense<0.000000e+00> : vector<2x1x8xf32>
    %6 = tpu.matmul %5, %0, %cst {dimension_numbers = #tpu.dot_dimension_numbers<[2], [2], [1], [1], [0, 0, 0, 1, 1, 1], [0], [0]>} : vector<2x1x32xf32>, vector<2x8x32xf32>, vector<2x1x8xf32> -> vector<2x1x8xf32>
    "tpu.trace_stop"() : () -> ()
    %7 = vector.shape_cast %6 : vector<2x1x8xf32> to vector<2x8xf32>
    %8 = vector.broadcast %1 : f32 to vector<2x8xf32>
    %9 = arith.addf %7, %8 : vector<2x8xf32>
    %cst_5 = arith.constant dense<0xFF800000> : vector<2xf32>
    %10 = vector.multi_reduction <maximumf>, %9, %cst_5 [1] : vector<2x8xf32> to vector<2xf32>
    %11 = vector.shape_cast %10 : vector<2xf32> to vector<2x1xf32>
    %12 = vector.broadcast %11 : vector<2x1xf32> to vector<2x8xf32>
    %13 = arith.subf %9, %12 : vector<2x8xf32>
    %14 = math.exp %13 : vector<2x8xf32>
    %cst_6 = arith.constant dense<0.000000e+00> : vector<2xf32>
    %15 = vector.multi_reduction <add>, %14, %cst_6 [1] : vector<2x8xf32> to vector<2xf32>
    %16 = vector.shape_cast %15 : vector<2xf32> to vector<2x1xf32>
    %17 = tpu.reciprocal %16 {approx = true} : vector<2x1xf32> -> vector<2x1xf32>
    %18 = arith.mulf %16, %17 : vector<2x1xf32>
    %cst_7 = arith.constant 2.000000e+00 : f32
    %19 = vector.broadcast %cst_7 : f32 to vector<2x1xf32>
    %20 = arith.subf %19, %18 : vector<2x1xf32>
    %21 = arith.mulf %17, %20 : vector<2x1xf32>
    %22 = vector.broadcast %21 : vector<2x1xf32> to vector<2x8xf32>
    %23 = arith.mulf %14, %22 : vector<2x8xf32>
    %c0_8 = arith.constant 0 : index
    %c0_9 = arith.constant 0 : index
    %24 = vector.load %arg5[%c0_8, %c0_9] : memref<2x8xf32, #tpu.memory_space<vmem>>, vector<2x8xf32>
    tpu.vector_store %arg5[%c0_8, %c0_9], %23 {strides = array<i32>} : memref<2x8xf32, #tpu.memory_space<vmem>>, vector<2x8xf32>,
    %25 = vector.shape_cast %23 : vector<2x8xf32> to vector<2x1x8xf32>
    "tpu.trace_start"() <{level = 10 : i32, message = "bqs,bsh->bqh"}> : () -> ()
    %cst_10 = arith.constant dense<0.000000e+00> : vector<2x1x32xf32>
    %26 = tpu.matmul %25, %0, %cst_10 {dimension_numbers = #tpu.dot_dimension_numbers<[2], [1], [1], [2], [0, 0, 0, 1, 1, 2], [0], [0]>} : vector<2x1x8xf32>, vector<2x8x32xf32>, vector<2x1x32xf32> -> vector<2x1x32xf32>
    "tpu.trace_stop"() : () -> ()
    %27 = vector.shape_cast %26 : vector<2x1x32xf32> to vector<2x32xf32>
    %c0_11 = arith.constant 0 : index
    %c0_12 = arith.constant 0 : index
    %28 = vector.load %arg4[%c0_11, %c0_12] : memref<2x32xf32, #tpu.memory_space<vmem>>, vector<2x32xf32>
    tpu.vector_store %arg4[%c0_11, %c0_12], %27 {strides = array<i32>} : memref<2x32xf32, #tpu.memory_space<vmem>>, vector<2x32xf32>,
    return
  }
  func.func @transform_0(%arg0: i32) -> (i32, i32, i32) {
    %c0_i32 = arith.constant 0 : i32
    %c0_i32_0 = arith.constant 0 : i32
    %c0_i32_1 = arith.constant 0 : i32
    return %arg0, %c0_i32, %c0_i32_0 : i32, i32, i32
  }
  func.func @transform_1(%arg0: i32) -> (i32, i32) {
    %c0_i32 = arith.constant 0 : i32
    %c0_i32_0 = arith.constant 0 : i32
    %c0_i32_1 = arith.constant 0 : i32
    return %c0_i32, %c0_i32_0 : i32, i32
  }
  func.func @transform_2(%arg0: i32) -> i32 {
    %c0_i32 = arith.constant 0 : i32
    %c0_i32_0 = arith.constant 0 : i32
    return %c0_i32 : i32
  }
  func.func @transform_3(%arg0: i32) -> (i32, i32) {
    %c0_i32 = arith.constant 0 : i32
    %c0_i32_0 = arith.constant 0 : i32
    return %arg0, %c0_i32 : i32, i32
  }
  func.func @transform_4(%arg0: i32) -> (i32, i32) {
    %c0_i32 = arith.constant 0 : i32
    %c0_i32_0 = arith.constant 0 : i32
    return %arg0, %c0_i32 : i32, i32
  }
}

</mosaic_0001>

<llo_original>
// kernel: tpu_custom_call.1
$region0: #{tpu_custom_call.1}
  #allocation0 [shape = 'u32[]', space=smem, size = 0x4, offset = 0x4, fixed_abs, tag = 'smem constant byte address 0x4 - core index']
  #allocation1 [shape = 'u32[144,128]{1,0:T(1,128)}', space=vmem, size = 0x12000, scoped, tag = 'internal scratch']
  #allocation2 [shape = 'f32[1]{0:T(128)S(6)}', space=smem, size = 0x200, scoped, tag = 'scoped memory for tpu_custom_call.1']
  %s0 = inlined_call_operand.hbm [shape: f32[2,8,32], index: 0, kind: input, shape index: {}]
  %s1 = inlined_call_operand.vmem [shape: f32[1,32], index: 1, kind: input, shape index: {}]
  %s2 = inlined_call_operand.<no memory space> [shape: f32[1], index: 2, kind: input, shape index: {}]
  %s3 = inlined_call_operand.hbm [shape: f32[2,32], index: 3, kind: output, shape index: {0}]
  %s4 = inlined_call_operand.hbm [shape: f32[2,8], index: 4, kind: output, shape index: {1}]
  %5 = xla_tuple %s3, %s4
  %s6 = sld [smem:[#allocation0]]
  $region34: #{tpu_custom_call.1} parent=0
    _
  %s8 = ssub.s32 1, %s6
  %s9 = scalar_select 0, %s8, %s6
  %10 = sst [smem:[#allocation2]] %s2
  $region1: #{tpu_custom_call.1} parent=0
    #allocation3 [shape = 'u8[8192]{0}', space=vmem, size = 0x2000, scoped, tag = 'input window, operand 0, single buffered']
    #allocation4 [shape = 's32[1]{0}', space=sflag, size = 0x4, scoped, tag = 'scoped memory for tpu_custom_call.1']
    #allocation5 [shape = 's32[1]{0}', space=sflag, size = 0x4, scoped, tag = 'scoped memory for tpu_custom_call.1']
    #allocation6 [shape = 'u8[1024]{0}', space=vmem, size = 0x400, scoped, tag = 'output window, operand 0, single buffered']
    #allocation7 [shape = 'u8[1024]{0}', space=vmem, size = 0x400, scoped, tag = 'output window, operand 1, single buffered']
    #allocation8 [shape = 's32[1]{0}', space=sflag, size = 0x4, scoped, tag = 'scoped memory for tpu_custom_call.1']
    %11 = vsyncpa [#allocation4], 0
    %12 = vsyncpa [#allocation5], 0
    %13 = vsyncpa [#allocation8], 0
    // Predicated region
    $region2: #{tpu_custom_call.1} parent=1 // pred_check
      _
    $region3: #{tpu_custom_call.1} parent=1 // pred_check_branch
      %15 = sbr.rel (0) target = $region5
    $region4: #{tpu_custom_call.1} parent=1 // pred_region
      %s17 = ssub.s32 256, 256
      %18 = vsyncadd [#allocation4], %s17
      %s19 = sshll.u32 [#allocation3], 4
      %s20 = int_to_ptr.vmem [resolvable:$true] %s19
      %25 = dma.hbm_to_vmem [thread:$0]  %s0, 256, %s20, [#allocation4], 128, 128, 8
    $region5: #{tpu_custom_call.1} parent=1 // pred_fallthru
      _
    // Predicated region
    $region6: #{tpu_custom_call.1} parent=1 // pred_check
      _
    $region7: #{tpu_custom_call.1} parent=1 // pred_check_branch
      %27 = sbr.rel (0) target = $region9
    $region8: #{tpu_custom_call.1} parent=1 // pred_region
      _
    $region9: #{tpu_custom_call.1} parent=1 // pred_fallthru
      _
    // Predicated region
    $region10: #{tpu_custom_call.1} parent=1 // pred_check
      _
    $region11: #{tpu_custom_call.1} parent=1 // pred_check_branch
      %29 = sbr.rel (0) target = $region13
    $region12: #{tpu_custom_call.1} parent=1 // pred_region
      _
    $region13: #{tpu_custom_call.1} parent=1 // pred_fallthru
      _
    // Predicated region
    $region14: #{tpu_custom_call.1} parent=1 // pred_check
      _
    $region15: #{tpu_custom_call.1} parent=1 // pred_check_branch
      %31 = sbr.rel (0) target = $region17
    $region16: #{tpu_custom_call.1} parent=1 // pred_region
      %32 = dma.done [#allocation4], 256
    $region17: #{tpu_custom_call.1} parent=1 // pred_fallthru
      _
    %v33 = vld [vmem:[#allocation3] sm:$0xff]
    %v34 = vld [vmem:[#allocation3 + $0x8] sm:$0xff]
    %s35 = sld [smem:[#allocation2]]
    %v36 = vld [vmem:[%s1] sm:$0x1]
    %vm37 = vcmask 261120
    %v39 = vsel %vm37, %v36, 0
    %v42 = vsel %vm37, %v33, 0
    %44 = vmatprep.subr.mxu0 0.0
    %45 = vmatpush1.xpose.msra.mxu0 %v42
    %46 = vmatprep.subr.mxu0 0.0
    %47 = vmatpush1.xpose.msra.mxu0 0.0
    %48 = vmatprep.subr.mxu0 0.0
    %49 = vmatpush1.xpose.msra.mxu0 0.0
    %50 = vmatprep.subr.mxu0 0.0
    %51 = vmatpush1.xpose.msra.mxu0 0.0
    %52 = vmatprep.subr.mxu0 0.0
    %53 = vmatpush1.xpose.msra.mxu0 0.0
    %54 = vmatprep.subr.mxu0 0.0
    %55 = vmatpush1.xpose.msra.mxu0 0.0
    %56 = vmatprep.subr.mxu0 0.0
    %57 = vmatpush1.xpose.msra.mxu0 0.0
    %58 = vmatprep.subr.mxu0 0.0
    %59 = vmatpush1.xpose.msra.mxu0 0.0
    %60 = vmatprep.subr.mxu0 0.0
    %61 = vmatpush1.xpose.msra.mxu0 0.0
    %62 = vmatprep.subr.mxu0 0.0
    %63 = vmatpush1.xpose.msra.mxu0 0.0
    %64 = vmatprep.subr.mxu0 0.0
    %65 = vmatpush1.xpose.msra.mxu0 0.0
    %66 = vmatprep.subr.mxu0 0.0
    %67 = vmatpush1.xpose.msra.mxu0 0.0
    %68 = vmatprep.subr.mxu0 0.0
    %69 = vmatpush1.xpose.msra.mxu0 0.0
    %70 = vmatprep.subr.mxu0 0.0
    %71 = vmatpush1.xpose.msra.mxu0 0.0
    %72 = vmatprep.subr.mxu0 0.0
    %73 = vmatpush1.xpose.msra.mxu0 0.0
    %74 = vmatprep.subr.mxu0 0.0
    %75 = vmatpush1.xpose.msra.mxu0 0.0
    %76 = vmatprep.subr.mxu0 0.0
    %77 = vmatpush1.xpose.msra.mxu0 0.0
    %78 = vmatprep.subr.mxu0 0.0
    %79 = vmatpush1.xpose.msra.mxu0 0.0
    %80 = vmatprep.subr.mxu0 0.0
    %81 = vmatpush1.xpose.msra.mxu0 0.0
    %82 = vmatprep.subr.mxu0 0.0
    %83 = vmatpush1.xpose.msra.mxu0 0.0
    %84 = vmatprep.subr.mxu0 0.0
    %85 = vmatpush1.xpose.msra.mxu0 0.0
    %86 = vmatprep.subr.mxu0 0.0
    %87 = vmatpush1.xpose.msra.mxu0 0.0
    %88 = vmatprep.subr.mxu0 0.0
    %89 = vmatpush1.xpose.msra.mxu0 0.0
    %90 = vmatprep.subr.mxu0 0.0
    %91 = vmatpush1.xpose.msra.mxu0 0.0
    %92 = vmatprep.subr.mxu0 0.0
    %93 = vmatpush1.xpose.msra.mxu0 0.0
    %94 = vmatprep.subr.mxu0 0.0
    %95 = vmatpush1.xpose.msra.mxu0 0.0
    %96 = vmatprep.subr.mxu0 0.0
    %97 = vmatpush1.xpose.msra.mxu0 0.0
    %98 = vmatprep.subr.mxu0 0.0
    %99 = vmatpush1.xpose.msra.mxu0 0.0
    %100 = vmatprep.subr.mxu0 0.0
    %101 = vmatpush1.xpose.msra.mxu0 0.0
    %102 = vmatprep.subr.mxu0 0.0
    %103 = vmatpush1.xpose.msra.mxu0 0.0
    %104 = vmatprep.subr.mxu0 0.0
    %105 = vmatpush1.xpose.msra.mxu0 0.0
    %106 = vmatprep.subr.mxu0 0.0
    %107 = vmatpush1.xpose.msra.mxu0 0.0
    %108 = vmatprep.mubr.f32.mxu0 0.0
    %109 = vmatmul.mubr.f32.gmra.mrb[0].mxu0 %v39
    %v110 = vpop.f32.mrb[0].mxu0
    %v111 = vadd.f32 0.0, %v110
    %v112 = vpop.f32.mrb[0].mxu0
    %113 = vdwg.mxu0
    %v115 = vsel %vm37, %v34, 0
    %117 = vmatprep.subr.mxu0 0.0
    %118 = vmatpush1.xpose.msra.mxu0 %v115
    %119 = vmatprep.subr.mxu0 0.0
    %120 = vmatpush1.xpose.msra.mxu0 0.0
    %121 = vmatprep.subr.mxu0 0.0
    %122 = vmatpush1.xpose.msra.mxu0 0.0
    %123 = vmatprep.subr.mxu0 0.0
    %124 = vmatpush1.xpose.msra.mxu0 0.0
    %125 = vmatprep.subr.mxu0 0.0
    %126 = vmatpush1.xpose.msra.mxu0 0.0
    %127 = vmatprep.subr.mxu0 0.0
    %128 = vmatpush1.xpose.msra.mxu0 0.0
    %129 = vmatprep.subr.mxu0 0.0
    %130 = vmatpush1.xpose.msra.mxu0 0.0
    %131 = vmatprep.subr.mxu0 0.0
    %132 = vmatpush1.xpose.msra.mxu0 0.0
    %133 = vmatprep.subr.mxu0 0.0
    %134 = vmatpush1.xpose.msra.mxu0 0.0
    %135 = vmatprep.subr.mxu0 0.0
    %136 = vmatpush1.xpose.msra.mxu0 0.0
    %137 = vmatprep.subr.mxu0 0.0
    %138 = vmatpush1.xpose.msra.mxu0 0.0
    %139 = vmatprep.subr.mxu0 0.0
    %140 = vmatpush1.xpose.msra.mxu0 0.0
    %141 = vmatprep.subr.mxu0 0.0
    %142 = vmatpush1.xpose.msra.mxu0 0.0
    %143 = vmatprep.subr.mxu0 0.0
    %144 = vmatpush1.xpose.msra.mxu0 0.0
    %145 = vmatprep.subr.mxu0 0.0
    %146 = vmatpush1.xpose.msra.mxu0 0.0
    %147 = vmatprep.subr.mxu0 0.0
    %148 = vmatpush1.xpose.msra.mxu0 0.0
    %149 = vmatprep.subr.mxu0 0.0
    %150 = vmatpush1.xpose.msra.mxu0 0.0
    %151 = vmatprep.subr.mxu0 0.0
    %152 = vmatpush1.xpose.msra.mxu0 0.0
    %153 = vmatprep.subr.mxu0 0.0
    %154 = vmatpush1.xpose.msra.mxu0 0.0
    %155 = vmatprep.subr.mxu0 0.0
    %156 = vmatpush1.xpose.msra.mxu0 0.0
    %157 = vmatprep.subr.mxu0 0.0
    %158 = vmatpush1.xpose.msra.mxu0 0.0
    %159 = vmatprep.subr.mxu0 0.0
    %160 = vmatpush1.xpose.msra.mxu0 0.0
    %161 = vmatprep.subr.mxu0 0.0
    %162 = vmatpush1.xpose.msra.mxu0 0.0
    %163 = vmatprep.subr.mxu0 0.0
    %164 = vmatpush1.xpose.msra.mxu0 0.0
    %165 = vmatprep.subr.mxu0 0.0
    %166 = vmatpush1.xpose.msra.mxu0 0.0
    %167 = vmatprep.subr.mxu0 0.0
    %168 = vmatpush1.xpose.msra.mxu0 0.0
    %169 = vmatprep.subr.mxu0 0.0
    %170 = vmatpush1.xpose.msra.mxu0 0.0
    %171 = vmatprep.subr.mxu0 0.0
    %172 = vmatpush1.xpose.msra.mxu0 0.0
    %173 = vmatprep.subr.mxu0 0.0
    %174 = vmatpush1.xpose.msra.mxu0 0.0
    %175 = vmatprep.subr.mxu0 0.0
    %176 = vmatpush1.xpose.msra.mxu0 0.0
    %177 = vmatprep.subr.mxu0 0.0
    %178 = vmatpush1.xpose.msra.mxu0 0.0
    %179 = vmatprep.subr.mxu0 0.0
    %180 = vmatpush1.xpose.msra.mxu0 0.0
    %181 = vmatprep.mubr.f32.mxu0 0.0
    %182 = vmatmul.mubr.f32.gmra.mrb[0].mxu0 %v39
    %v183 = vpop.f32.mrb[0].mxu0
    %v184 = vadd.f32 0.0, %v183
    %v185 = vpop.f32.mrb[0].mxu0
    %186 = vdwg.mxu0
    %v187 = vstv %s35
    %v188 = vadd.f32 %v111, %v187
    %v189 = vadd.f32 %v184, %v187
    %v192 = vrot.slane %v189, 7
    %vm193 = vcmask 1041409
    %v194 = vsel %vm193, %v192, %v188
    %vm196 = vcmask 58368
    %v197 = vsel %vm196, %v194, -inf
    %198 = vmax.xlane.f32.xlu0 %v197
    %v199 = vpop.xlane.xlu0 %198
    %v201 = vrot.slane %v199, 1
    %v204 = vsub.f32 %v188, %v199
    %v205 = vsub.f32 %v189, %v201
    %v206 = vmul.f32 %v204, 1.442695
    %v207 = vpow.pop %v206
    %v208 = vmul.f32 %v205, 1.442695
    %v209 = vpow.pop %v208
    %v212 = vrot.slane %v209, 7
    %v213 = vsel %vm193, %v212, %v207
    %v215 = vsel %vm196, %v213, 0.0
    %216 = vadd.xlane.f32.xlu0 %v215
    %v217 = vpop.xlane.xlu0 %216
    %v218 = vrcp.pop %v217
    %v219 = vmul.f32 %v217, %v218
    %v220 = vsub.f32 2.0, %v219
    %v221 = vmul.f32 %v218, %v220
    %v223 = vrot.slane %v221, 1
    %v226 = vmul.f32 %v207, %v221
    %v227 = vmul.f32 %v209, %v223
    %v230 = vrot.slane %v227, 7
    %v231 = vsel %vm193, %v230, %v226
    %233 = vst.msk [vmem:[#allocation7] sm:$0x3] %vm196, %v231
    %vm234 = vcmask 64512
    %v235 = vsel %vm234, %v226, 0
    %237 = vmatprep.subr.mxu0 0.0
    %238 = vmatpush1.msra.mxu0 %v33
    %239 = vmatprep.subr.mxu0 0.0
    %240 = vmatpush1.msra.mxu0 0.0
    %241 = vmatprep.subr.mxu0 0.0
    %242 = vmatpush1.msra.mxu0 0.0
    %243 = vmatprep.subr.mxu0 0.0
    %244 = vmatpush1.msra.mxu0 0.0
    %245 = vmatprep.subr.mxu0 0.0
    %246 = vmatpush1.msra.mxu0 0.0
    %247 = vmatprep.subr.mxu0 0.0
    %248 = vmatpush1.msra.mxu0 0.0
    %249 = vmatprep.subr.mxu0 0.0
    %250 = vmatpush1.msra.mxu0 0.0
    %251 = vmatprep.subr.mxu0 0.0
    %252 = vmatpush1.msra.mxu0 0.0
    %253 = vmatprep.subr.mxu0 0.0
    %254 = vmatpush1.msra.mxu0 0.0
    %255 = vmatprep.subr.mxu0 0.0
    %256 = vmatpush1.msra.mxu0 0.0
    %257 = vmatprep.subr.mxu0 0.0
    %258 = vmatpush1.msra.mxu0 0.0
    %259 = vmatprep.subr.mxu0 0.0
    %260 = vmatpush1.msra.mxu0 0.0
    %261 = vmatprep.subr.mxu0 0.0
    %262 = vmatpush1.msra.mxu0 0.0
    %263 = vmatprep.subr.mxu0 0.0
    %264 = vmatpush1.msra.mxu0 0.0
    %265 = vmatprep.subr.mxu0 0.0
    %266 = vmatpush1.msra.mxu0 0.0
    %267 = vmatprep.subr.mxu0 0.0
    %268 = vmatpush1.msra.mxu0 0.0
    %269 = vmatprep.subr.mxu0 0.0
    %270 = vmatpush1.msra.mxu0 0.0
    %271 = vmatprep.subr.mxu0 0.0
    %272 = vmatpush1.msra.mxu0 0.0
    %273 = vmatprep.subr.mxu0 0.0
    %274 = vmatpush1.msra.mxu0 0.0
    %275 = vmatprep.subr.mxu0 0.0
    %276 = vmatpush1.msra.mxu0 0.0
    %277 = vmatprep.subr.mxu0 0.0
    %278 = vmatpush1.msra.mxu0 0.0
    %279 = vmatprep.subr.mxu0 0.0
    %280 = vmatpush1.msra.mxu0 0.0
    %281 = vmatprep.subr.mxu0 0.0
    %282 = vmatpush1.msra.mxu0 0.0
    %283 = vmatprep.subr.mxu0 0.0
    %284 = vmatpush1.msra.mxu0 0.0
    %285 = vmatprep.subr.mxu0 0.0
    %286 = vmatpush1.msra.mxu0 0.0
    %287 = vmatprep.subr.mxu0 0.0
    %288 = vmatpush1.msra.mxu0 0.0
    %289 = vmatprep.subr.mxu0 0.0
    %290 = vmatpush1.msra.mxu0 0.0
    %291 = vmatprep.subr.mxu0 0.0
    %292 = vmatpush1.msra.mxu0 0.0
    %293 = vmatprep.subr.mxu0 0.0
    %294 = vmatpush1.msra.mxu0 0.0
    %295 = vmatprep.subr.mxu0 0.0
    %296 = vmatpush1.msra.mxu0 0.0
    %297 = vmatprep.subr.mxu0 0.0
    %298 = vmatpush1.msra.mxu0 0.0
    %299 = vmatprep.subr.mxu0 0.0
    %300 = vmatpush1.msra.mxu0 0.0
    %301 = vmatprep.mubr.f32.mxu0 0.0
    %302 = vmatmul.mubr.f32.gmra.mrb[0].mxu0 %v235
    %v303 = vpop.f32.mrb[0].mxu0
    %v304 = vadd.f32 0.0, %v303
    %v305 = vpop.f32.mrb[0].mxu0
    %306 = vdwg.mxu0
    %v307 = vsel %vm234, %v227, 0
    %309 = vmatprep.subr.mxu0 0.0
    %310 = vmatpush1.msra.mxu0 %v34
    %311 = vmatprep.subr.mxu0 0.0
    %312 = vmatpush1.msra.mxu0 0.0
    %313 = vmatprep.subr.mxu0 0.0
    %314 = vmatpush1.msra.mxu0 0.0
    %315 = vmatprep.subr.mxu0 0.0
    %316 = vmatpush1.msra.mxu0 0.0
    %317 = vmatprep.subr.mxu0 0.0
    %318 = vmatpush1.msra.mxu0 0.0
    %319 = vmatprep.subr.mxu0 0.0
    %320 = vmatpush1.msra.mxu0 0.0
    %321 = vmatprep.subr.mxu0 0.0
    %322 = vmatpush1.msra.mxu0 0.0
    %323 = vmatprep.subr.mxu0 0.0
    %324 = vmatpush1.msra.mxu0 0.0
    %325 = vmatprep.subr.mxu0 0.0
    %326 = vmatpush1.msra.mxu0 0.0
    %327 = vmatprep.subr.mxu0 0.0
    %328 = vmatpush1.msra.mxu0 0.0
    %329 = vmatprep.subr.mxu0 0.0
    %330 = vmatpush1.msra.mxu0 0.0
    %331 = vmatprep.subr.mxu0 0.0
    %332 = vmatpush1.msra.mxu0 0.0
    %333 = vmatprep.subr.mxu0 0.0
    %334 = vmatpush1.msra.mxu0 0.0
    %335 = vmatprep.subr.mxu0 0.0
    %336 = vmatpush1.msra.mxu0 0.0
    %337 = vmatprep.subr.mxu0 0.0
    %338 = vmatpush1.msra.mxu0 0.0
    %339 = vmatprep.subr.mxu0 0.0
    %340 = vmatpush1.msra.mxu0 0.0
    %341 = vmatprep.subr.mxu0 0.0
    %342 = vmatpush1.msra.mxu0 0.0
    %343 = vmatprep.subr.mxu0 0.0
    %344 = vmatpush1.msra.mxu0 0.0
    %345 = vmatprep.subr.mxu0 0.0
    %346 = vmatpush1.msra.mxu0 0.0
    %347 = vmatprep.subr.mxu0 0.0
    %348 = vmatpush1.msra.mxu0 0.0
    %349 = vmatprep.subr.mxu0 0.0
    %350 = vmatpush1.msra.mxu0 0.0
    %351 = vmatprep.subr.mxu0 0.0
    %352 = vmatpush1.msra.mxu0 0.0
    %353 = vmatprep.subr.mxu0 0.0
    %354 = vmatpush1.msra.mxu0 0.0
    %355 = vmatprep.subr.mxu0 0.0
    %356 = vmatpush1.msra.mxu0 0.0
    %357 = vmatprep.subr.mxu0 0.0
    %358 = vmatpush1.msra.mxu0 0.0
    %359 = vmatprep.subr.mxu0 0.0
    %360 = vmatpush1.msra.mxu0 0.0
    %361 = vmatprep.subr.mxu0 0.0
    %362 = vmatpush1.msra.mxu0 0.0
    %363 = vmatprep.subr.mxu0 0.0
    %364 = vmatpush1.msra.mxu0 0.0
    %365 = vmatprep.subr.mxu0 0.0
    %366 = vmatpush1.msra.mxu0 0.0
    %367 = vmatprep.subr.mxu0 0.0
    %368 = vmatpush1.msra.mxu0 0.0
    %369 = vmatprep.subr.mxu0 0.0
    %370 = vmatpush1.msra.mxu0 0.0
    %371 = vmatprep.subr.mxu0 0.0
    %372 = vmatpush1.msra.mxu0 0.0
    %373 = vmatprep.mubr.f32.mxu0 0.0
    %374 = vmatmul.mubr.f32.gmra.mrb[0].mxu0 %v307
    %v375 = vpop.f32.mrb[0].mxu0
    %v376 = vadd.f32 0.0, %v375
    %v377 = vpop.f32.mrb[0].mxu0
    %378 = vdwg.mxu0
    %v381 = vrot.slane %v376, 7
    %v382 = vsel %vm193, %v381, %v304
    %vm384 = vcmask 254976
    %385 = vst.msk [vmem:[#allocation6] sm:$0x3] %vm384, %v382
    // Predicated region
    $region18: #{tpu_custom_call.1} parent=1 // pred_check
      _
    $region19: #{tpu_custom_call.1} parent=1 // pred_check_branch
      %387 = sbr.rel (0) target = $region21
    $region20: #{tpu_custom_call.1} parent=1 // pred_region
      %s389 = ssub.s32 32, 32
      %390 = vsyncadd [#allocation5], %s389
      %s392 = sshll.u32 [#allocation6], 4
      %s393 = int_to_ptr.vmem [resolvable:$true] %s392
      %395 = dma.vmem_to_hbm [thread:$0]  %s393, 32, %s3, [#allocation5]
    $region21: #{tpu_custom_call.1} parent=1 // pred_fallthru
      _
    // Predicated region
    $region22: #{tpu_custom_call.1} parent=1 // pred_check
      _
    $region23: #{tpu_custom_call.1} parent=1 // pred_check_branch
      %397 = sbr.rel (0) target = $region25
    $region24: #{tpu_custom_call.1} parent=1 // pred_region
      %s399 = ssub.s32 32, 32
      %400 = vsyncadd [#allocation8], %s399
      %s402 = sshll.u32 [#allocation7], 4
      %s403 = int_to_ptr.vmem [resolvable:$true] %s402
      %405 = dma.vmem_to_hbm [thread:$0]  %s403, 32, %s4, [#allocation8]
    $region25: #{tpu_custom_call.1} parent=1 // pred_fallthru
      _
    // Predicated region
    $region26: #{tpu_custom_call.1} parent=1 // pred_check
      _
    $region27: #{tpu_custom_call.1} parent=1 // pred_check_branch
      %407 = sbr.rel (0) target = $region29
    $region28: #{tpu_custom_call.1} parent=1 // pred_region
      %408 = dma.done [#allocation5], 32
    $region29: #{tpu_custom_call.1} parent=1 // pred_fallthru
      _
    // Predicated region
    $region30: #{tpu_custom_call.1} parent=1 // pred_check
      _
    $region31: #{tpu_custom_call.1} parent=1 // pred_check_branch
      %410 = sbr.rel (0) target = $region33
    $region32: #{tpu_custom_call.1} parent=1 // pred_region
      %411 = dma.done [#allocation8], 32
    $region33: #{tpu_custom_call.1} parent=1 // pred_fallthru
      _
    %412 = vsyncpa [#allocation4], 1
    %413 = vsyncpa [#allocation5], 1
    %414 = vsyncpa [#allocation8], 1

</llo_original>
